<compile_context>
chip_gen: v5e
topology: v5e:2x2
jax: 0.10.0
libtpu: 0.0.40
codegen_flags: <defaults>
</compile_context>

<pallas_src>
import functools
import math

import jax
import jax.numpy as jnp
from jax.experimental import pallas as pl
from jax.experimental.pallas import tpu as pltpu


def _mhsa_group_kernel(x_ref, wqkv_ref, bqkv_ref, wo_ref, bo_ref, kpm_ref,
                       out_ref, w_ref, bias_ref, *, n_heads, head_group):
    """One (batch-block, head-group) grid step of fused causal MHSA.

    Grid = (B // bt, H // hg) with the head-group axis innermost: the output
    blocks are indexed by the batch axis only, stay resident in VMEM across
    groups and act as accumulators for the per-group out-projection
    contributions and the head-summed attention weights.
    """
    bt, S, E = x_ref.shape
    D = E // n_heads
    hg = head_group
    g = pl.program_id(1)

    # Resident weights expose every head group (leading dim > 1): select this
    # step's group with a dynamic first-axis index.  The large-E fallback
    # streams one group per step, so the in-block index is 0.
    w_idx = g if wqkv_ref.shape[0] > 1 else 0

    # First head-group of each batch block: build the additive causal +
    # key-padding mask bias once and init the resident accumulators
    # (out starts at the out-projection bias).
    @pl.when(g == 0)
    def _():
        rows = jax.lax.broadcasted_iota(jnp.int32, (S, S), 0)
        cols = jax.lax.broadcasted_iota(jnp.int32, (S, S), 1)
        keep = (cols <= rows)[None] & (kpm_ref[...] != 0)              # (bt, S, S)
        bias_ref[...] = jnp.where(keep, 0.0, -jnp.inf).astype(bias_ref.dtype)
        out_ref[...] = jnp.broadcast_to(bo_ref[...], (bt, S, E)).astype(out_ref.dtype)
        w_ref[...] = jnp.zeros_like(w_ref)

    # Fused QKV projection for this head group: one bf16 MXU matmul (f32
    # accumulation) over all bt*S rows, output width hg*3D.  1/sqrt(D) is
    # pre-folded into W_q / b_q; x is already bf16.
    x = x_ref[...].reshape(bt * S, E)
    qkv = jax.lax.dot_general(x, wqkv_ref[w_idx], (((1,), (1,)), ((), ())),
                              preferred_element_type=jnp.float32) + bqkv_ref[w_idx]

    bias = bias_ref[...]                                               # (bt, S, S) f32
    wo_blk = wo_ref[w_idx]                                             # (E, hg*D) bf16
    w_sum = None
    out_acc = None
    for j in range(hg):                                                # static unroll
        base = j * 3 * D
        q = qkv[:, base:base + D].reshape(bt, S, D)
        k = qkv[:, base + D:base + 2 * D].reshape(bt, S, D)
        v = qkv[:, base + 2 * D:base + 3 * D].reshape(bt, S, D)

        # Scores on the MXU in bf16 (f32 accumulation); masks added as f32 bias.
        s = jnp.einsum('bqd,bkd->bqk',
                       q.astype(jnp.bfloat16), k.astype(jnp.bfloat16),
                       preferred_element_type=jnp.float32) + bias

        # Numerically stable softmax in f32; approx reciprocal runs on the EUP.
        m = jnp.max(s, axis=-1, keepdims=True)
        p = jnp.exp(s - m)
        attn = p * pl.reciprocal(jnp.sum(p, axis=-1, keepdims=True), approx=True)
        w_sum = attn if w_sum is None else w_sum + attn

        # attn @ V and this head's slice of the output projection (bf16 MXU,
        # f32 register accumulation; a single RMW of out_ref per group).
        ctx = jnp.einsum('bqk,bkd->bqd',
                         attn.astype(jnp.bfloat16), v.astype(jnp.bfloat16),
                         preferred_element_type=jnp.float32)
        o_j = jax.lax.dot_general(ctx.reshape(bt * S, D).astype(jnp.bfloat16),
                                  wo_blk[:, j * D:(j + 1) * D],
                                  (((1,), (1,)), ((), ())),
                                  preferred_element_type=jnp.float32)
        out_acc = o_j if out_acc is None else out_acc + o_j

    # Raw (unscaled) head-summed attention weights; the 1/n_heads average is
    # deferred to the last group.  Both accumulators are resident output blocks.
    w_ref[...] += w_sum.astype(w_ref.dtype)
    out_ref[...] += out_acc.reshape(bt, S, E).astype(out_ref.dtype)

    @pl.when(g == pl.num_programs(1) - 1)
    def _():
        w_ref[...] = (w_ref[...].astype(jnp.float32) * (1.0 / n_heads)).astype(w_ref.dtype)


def _pick_batch_block(B, S, target_rows=512):
    """Largest divisor of B (capped at B//2 so the parallel grid axis has >=2
    steps for v7x's two TensorCores) whose block feeds ~target_rows MXU rows."""
    cap = max(1, B // 2)
    bt = max(1, min(cap, target_rows // max(S, 1)))
    while B % bt:
        bt -= 1
    return bt


def _pick_head_group(n_heads, head_dim, max_group=4, max_width=256):
    """Heads fused per grid step: widens the per-step QKV matmul (hg*3D) and cuts
    grid steps / output-accumulator RMWs, without dynamic lane-offset stores."""
    hg = 1
    for cand in range(1, min(n_heads, max_group) + 1):
        if n_heads % cand == 0 and cand * head_dim <= max_width:
            hg = cand
    return hg


def torch_causal_attention(x, key_padding_mask, params, n_heads):
    """Pallas implementation of TorchCausalAttention.forward.

    x:                (B, S, E) float32
    key_padding_mask: (B, S) bool, True = valid token (module negates it internally)
    returns (attn_output (B,S,E) f32, attn_weights averaged over heads (B,S,S) bf16)
    """
    B, S, E = x.shape
    H = n_heads
    D = E // H
    bt = _pick_batch_block(B, S)
    hg = _pick_head_group(H, D)
    G = H // hg

    # ---- parameter prep (pure-XLA layout plumbing, done once per call) ----
    scale = 1.0 / math.sqrt(D)
    qscale = jnp.concatenate([jnp.full((E,), scale, jnp.float32),
                              jnp.ones((2 * E,), jnp.float32)])
    w_in = params["in_proj_weight"].astype(jnp.float32) * qscale[:, None]   # (3E, E), q rows pre-scaled
    b_in = params["in_proj_bias"].astype(jnp.float32) * qscale              # (3E,)

    # [Wq; Wk; Wv] -> per-head (H, 3D, E) -> per-group (G, hg*3D, E), bf16.
    wqkv_g = (w_in.reshape(3, H, D, E).transpose(1, 0, 2, 3)
                  .reshape(G, hg * 3 * D, E).astype(jnp.bfloat16))
    bqkv_g = (b_in.reshape(3, H, D).transpose(1, 0, 2)
                  .reshape(G, 1, hg * 3 * D))
    # out_proj.weight columns grouped per head-group: (G, E, hg*D), bf16.
    wo_g = (params["out_proj_weight"].astype(jnp.float32)
                .reshape(E, G, hg * D).transpose(1, 0, 2).astype(jnp.bfloat16))
    bo = params["out_proj_bias"].astype(jnp.float32).reshape(1, E)
    # Module forward passes ~key_padding_mask: True here means "valid key".
    kpm = key_padding_mask.astype(jnp.int32).reshape(B, 1, S)

    # Resident-weights guard: total bf16 weights ~ 8*E^2 bytes; keep them
    # resident (one DMA) unless they would crowd out activations in VMEM.
    weight_bytes = 8 * E * E + 16 * E
    resident = weight_bytes <= 12 * 1024 * 1024
    if resident:
        wqkv_spec = pl.BlockSpec((G, hg * 3 * D, E), lambda b, g: (0, 0, 0))
        bqkv_spec = pl.BlockSpec((G, 1, hg * 3 * D), lambda b, g: (0, 0, 0))
        wo_spec = pl.BlockSpec((G, E, hg * D), lambda b, g: (0, 0, 0))
    else:
        wqkv_spec = pl.BlockSpec((1, hg * 3 * D, E), lambda b, g: (g, 0, 0))
        bqkv_spec = pl.BlockSpec((1, 1, hg * 3 * D), lambda b, g: (g, 0, 0))
        wo_spec = pl.BlockSpec((1, E, hg * D), lambda b, g: (g, 0, 0))

    # Explicit scoped-VMEM limit: rough per-step accounting with headroom,
    # clamped to 64 MiB so the value is valid on v7x (and above v5e's 16 MiB /
    # v6e's 32 MiB defaults).
    f32b, bf16b = 4, 2
    vmem_weights = 2 * (weight_bytes if resident else weight_bytes // G)
    vmem_blocks = (2 * bt * S * E * bf16b        # x (double-buffered)
                   + 2 * bt * S * f32b           # key-padding mask
                   + 2 * bt * S * E * f32b       # out accumulator block
                   + 2 * bt * S * S * bf16b)     # weights accumulator block
    vmem_scratch = bt * S * S * f32b
    vmem_temps = (8 * bt * S * S + 4 * bt * S * hg * 3 * D) * f32b
    vmem_limit = int(min(64 * 2**20,
                         max(32 * 2**20,
                             2 * (vmem_weights + vmem_blocks + vmem_scratch + vmem_temps))))

    kernel = functools.partial(_mhsa_group_kernel, n_heads=H, head_group=hg)

    flops = 2 * B * S * E * (3 * E) + 4 * B * H * S * S * D + 2 * B * S * E * E
    w_traffic = weight_bytes if resident else weight_bytes * (B // bt)
    bytes_accessed = (2 * B * S * E            # x (bf16)
                      + 4 * B * S * E          # out (f32)
                      + 2 * B * S * S          # averaged weights (bf16)
                      + 4 * B * S              # padding mask (int32)
                      + w_traffic)             # weights fetched once when resident
    cost = pl.CostEstimate(flops=flops, transcendentals=B * H * S * S,
                           bytes_accessed=bytes_accessed)

    out, w = pl.pallas_call(
        kernel,
        out_shape=(jax.ShapeDtypeStruct((B, S, E), jnp.float32),
                   jax.ShapeDtypeStruct((B, S, S), jnp.bfloat16)),
        grid=(B // bt, G),
        in_specs=[
            pl.BlockSpec((bt, S, E), lambda b, g: (b, 0, 0)),      # x (bf16, once per batch block)
            wqkv_spec,                                             # per-group [Wq;Wk;Wv]
            bqkv_spec,                                             # per-group [bq;bk;bv]
            wo_spec,                                               # per-group out-proj slice
            pl.BlockSpec((1, E), lambda b, g: (0, 0)),             # out-proj bias
            pl.BlockSpec((bt, 1, S), lambda b, g: (b, 0, 0)),      # key-padding mask (int32)
        ],
        out_specs=(pl.BlockSpec((bt, S, E), lambda b, g: (b, 0, 0)),
                   pl.BlockSpec((bt, S, S), lambda b, g: (b, 0, 0))),
        scratch_shapes=[pltpu.VMEM((bt, S, S), jnp.float32)],      # additive mask bias
        compiler_params=pltpu.CompilerParams(
            dimension_semantics=("parallel", "arbitrary"),
            vmem_limit_bytes=vmem_limit),
        cost_estimate=cost,
    )(x.astype(jnp.bfloat16), wqkv_g, bqkv_g, wo_g, bo, kpm)
    return out, w


def _reference(x, key_padding_mask, params, n_heads):
    """Pure-JAX reference mirroring nn.MultiheadAttention forward semantics (f32)."""
    B, S, E = x.shape
    D = E // n_heads
    qkv = x @ params["in_proj_weight"].T + params["in_proj_bias"]
    q, k, v = jnp.split(qkv, 3, axis=-1)
    q = q.reshape(B, S, n_heads, D).transpose(0, 2, 1, 3) / math.sqrt(D)
    k = k.reshape(B, S, n_heads, D).transpose(0, 2, 1, 3)
    v = v.reshape(B, S, n_heads, D).transpose(0, 2, 1, 3)
    s = jnp.einsum('bhqd,bhkd->bhqk', q, k)
    amask = jnp.triu(jnp.full((S, S), -jnp.inf, jnp.float32), k=1)
    kbias = jnp.where(key_padding_mask, 0.0, -jnp.inf)[:, None, None, :]
    s = s + amask + kbias
    attn = jax.nn.softmax(s, axis=-1)
    ctx = jnp.einsum('bhqk,bhkd->bhqd', attn, v).transpose(0, 2, 1, 3).reshape(B, S, E)
    out = ctx @ params["out_proj_weight"].T + params["out_proj_bias"]
    return out, attn.mean(axis=1)


if __name__ == "__main__":
    B, S, E, H = 2, 8, 32, 4   # cfg.d_model=32, cfg.n_heads=4, seq_len=8

    key = jax.random.PRNGKey(0)
    kx, kw1, kb1, kw2, kb2 = jax.random.split(key, 5)

    x = jax.random.normal(kx, (B, S, E), jnp.float32)
    params = {
        "in_proj_weight": jax.random.normal(kw1, (3 * E, E), jnp.float32) * (1.0 / math.sqrt(E)),
        "in_proj_bias": jax.random.normal(kb1, (3 * E,), jnp.float32) * 0.02,
        "out_proj_weight": jax.random.normal(kw2, (E, E), jnp.float32) * (1.0 / math.sqrt(E)),
        "out_proj_bias": jax.random.normal(kb2, (E,), jnp.float32) * 0.02,
    }

    # key_padding_mask: True = valid. Pad last 2 positions of the second sequence.
    key_padding_mask = jnp.ones((B, S), dtype=bool).at[1, S - 2:].set(False)

    out, w = torch_causal_attention(x, key_padding_mask, params, H)
    out = jax.block_until_ready(out)
    w = jax.block_until_ready(w)

    ref_out, ref_w = _reference(x, key_padding_mask, params, H)
    # bf16 MXU inputs everywhere (incl. QK^T, per the perf review), f32
    # accumulation, approx reciprocal, bf16 weights output -> tolerances looser
    # than a pure-f32 kernel.
    assert jnp.allclose(out, ref_out, atol=1e-1, rtol=5e-2), \
        float(jnp.max(jnp.abs(out - ref_out)))
    w32 = w.astype(jnp.float32)
    assert jnp.allclose(w32, ref_w, atol=3e-2, rtol=5e-2), \
        float(jnp.max(jnp.abs(w32 - ref_w)))

    print("KERNEL_OK")
</pallas_src>

<mosaic_0001>
module attributes {stable_mosaic.version = 11 : i64} {
  func.func @_mhsa_group_kernel(%arg0: i32, %arg1: i32, %arg2: memref<1x8x32xbf16, #tpu.memory_space<vmem>>, %arg3: memref<1x96x32xbf16, #tpu.memory_space<vmem>>, %arg4: memref<1x1x96xf32, #tpu.memory_space<vmem>>, %arg5: memref<1x32x32xbf16, #tpu.memory_space<vmem>>, %arg6: memref<1x32xf32, #tpu.memory_space<vmem>>, %arg7: memref<1x1x8xi32, #tpu.memory_space<vmem>>, %arg8: memref<1x8x32xf32, #tpu.memory_space<vmem>>, %arg9: memref<1x8x8xbf16, #tpu.memory_space<vmem>>, %arg10: memref<1x8x8xf32, #tpu.memory_space<vmem>>) attributes {dimension_semantics = [#tpu.dimension_semantics<parallel>, #tpu.dimension_semantics<arbitrary>], iteration_bounds = array<i64: 2, 1>, scalar_prefetch = 0 : i64, scratch_operands = 1 : i64, tpu.core_type = #tpu.core_type<tc>, window_params = [{transform_indices = @transform_0, window_bounds = array<i64: 1, 8, 32>}, {pipeline_mode = #tpu.pipeline_mode<synchronous>, transform_indices = @transform_1, window_bounds = array<i64: 1, 96, 32>}, {pipeline_mode = #tpu.pipeline_mode<synchronous>, transform_indices = @transform_2, window_bounds = array<i64: 1, 1, 96>}, {pipeline_mode = #tpu.pipeline_mode<synchronous>, transform_indices = @transform_3, window_bounds = array<i64: 1, 32, 32>}, {pipeline_mode = #tpu.pipeline_mode<synchronous>, transform_indices = @transform_4, window_bounds = array<i64: 1, 32>}, {transform_indices = @transform_5, window_bounds = array<i64: 1, 1, 8>}, {transform_indices = @transform_6, window_bounds = array<i64: 1, 8, 32>}, {transform_indices = @transform_7, window_bounds = array<i64: 1, 8, 8>}]} {
    %c0_i32 = arith.constant 0 : i32
    %0 = arith.cmpi eq, %arg1, %c0_i32 : i32
    %1 = arith.extui %0 : i1 to i32
    %c0_i32_0 = arith.constant 0 : i32
    %2 = arith.cmpi ne, %1, %c0_i32_0 : i32
    scf.if %2 {
      %140 = tpu.iota {dimensions = array<i32: 0>} : vector<8x8xi32>
      %141 = tpu.iota {dimensions = array<i32: 1>} : vector<8x8xi32>
      %142 = arith.cmpi sle, %141, %140 : vector<8x8xi32>
      %143 = vector.shape_cast %142 : vector<8x8xi1> to vector<1x8x8xi1>
      %c0_49 = arith.constant 0 : index
      %c0_50 = arith.constant 0 : index
      %c0_51 = arith.constant 0 : index
      %144 = vector.load %arg7[%c0_49, %c0_50, %c0_51] : memref<1x1x8xi32, #tpu.memory_space<vmem>>, vector<1x1x8xi32>
      %c0_i32_52 = arith.constant 0 : i32
      %145 = vector.broadcast %c0_i32_52 : i32 to vector<1x1x8xi32>
      %146 = arith.cmpi ne, %144, %145 : vector<1x1x8xi32>
      %147 = vector.broadcast %146 : vector<1x1x8xi1> to vector<1x8x8xi1>
      %148 = arith.andi %143, %147 : vector<1x8x8xi1>
      %cst_53 = arith.constant 0.000000e+00 : f32
      %cst_54 = arith.constant 0xFF800000 : f32
      %149 = vector.broadcast %cst_53 : f32 to vector<1x8x8xf32>
      %150 = vector.broadcast %cst_54 : f32 to vector<1x8x8xf32>
      %151 = arith.select %148, %149, %150 : vector<1x8x8xi1>, vector<1x8x8xf32>
      %c0_55 = arith.constant 0 : index
      %c0_56 = arith.constant 0 : index
      %c0_57 = arith.constant 0 : index
      %152 = vector.load %arg10[%c0_55, %c0_56, %c0_57] : memref<1x8x8xf32, #tpu.memory_space<vmem>>, vector<1x8x8xf32>
      tpu.vector_store %arg10[%c0_55, %c0_56, %c0_57], %151 {strides = array<i32>} : memref<1x8x8xf32, #tpu.memory_space<vmem>>, vector<1x8x8xf32>,
      %c0_58 = arith.constant 0 : index
      %c0_59 = arith.constant 0 : index
      %153 = vector.load %arg6[%c0_58, %c0_59] : memref<1x32xf32, #tpu.memory_space<vmem>>, vector<1x32xf32>
      %154 = vector.shape_cast %153 : vector<1x32xf32> to vector<1x1x32xf32>
      %155 = vector.broadcast %154 : vector<1x1x32xf32> to vector<1x8x32xf32>
      %c0_60 = arith.constant 0 : index
      %c0_61 = arith.constant 0 : index
      %c0_62 = arith.constant 0 : index
      %156 = vector.load %arg8[%c0_60, %c0_61, %c0_62] : memref<1x8x32xf32, #tpu.memory_space<vmem>>, vector<1x8x32xf32>
      tpu.vector_store %arg8[%c0_60, %c0_61, %c0_62], %155 {strides = array<i32>} : memref<1x8x32xf32, #tpu.memory_space<vmem>>, vector<1x8x32xf32>,
      %cst_63 = arith.constant 0.000000e+00 : bf16
      %157 = vector.broadcast %cst_63 : bf16 to vector<1x8x8xbf16>
      %c0_64 = arith.constant 0 : index
      %c0_65 = arith.constant 0 : index
      %c0_66 = arith.constant 0 : index
      %158 = vector.load %arg9[%c0_64, %c0_65, %c0_66] : memref<1x8x8xbf16, #tpu.memory_space<vmem>>, vector<1x8x8xbf16>
      tpu.vector_store %arg9[%c0_64, %c0_65, %c0_66], %157 {strides = array<i32>} : memref<1x8x8xbf16, #tpu.memory_space<vmem>>, vector<1x8x8xbf16>,
    } else {
    }
    %c0 = arith.constant 0 : index
    %c0_1 = arith.constant 0 : index
    %c0_2 = arith.constant 0 : index
    %3 = vector.load %arg2[%c0, %c0_1, %c0_2] : memref<1x8x32xbf16, #tpu.memory_space<vmem>>, vector<1x8x32xbf16>
    %4 = vector.shape_cast %3 : vector<1x8x32xbf16> to vector<8x32xbf16>
    %c0_3 = arith.constant 0 : index
    %c0_4 = arith.constant 0 : index
    %c0_5 = arith.constant 0 : index
    %5 = vector.load %arg3[%c0_3, %c0_4, %c0_5] : memref<1x96x32xbf16, #tpu.memory_space<vmem>>, vector<1x96x32xbf16>
    %6 = vector.shape_cast %5 : vector<1x96x32xbf16> to vector<96x32xbf16>
    %cst = arith.constant dense<0.000000e+00> : vector<8x96xf32>
    %7 = tpu.matmul %4, %6, %cst {dimension_numbers = #tpu.dot_dimension_numbers<[1], [1], [0], [0], [0, 0, 1, 0], [], []>} : vector<8x32xbf16>, vector<96x32xbf16>, vector<8x96xf32> -> vector<8x96xf32>
    %c0_6 = arith.constant 0 : index
    %c0_7 = arith.constant 0 : index
    %c0_8 = arith.constant 0 : index
    %8 = vector.load %arg4[%c0_6, %c0_7, %c0_8] : memref<1x1x96xf32, #tpu.memory_space<vmem>>, vector<1x1x96xf32>
    %9 = vector.shape_cast %8 : vector<1x1x96xf32> to vector<1x96xf32>
    %10 = vector.broadcast %9 : vector<1x96xf32> to vector<8x96xf32>
    %11 = arith.addf %7, %10 : vector<8x96xf32>
    %c0_9 = arith.constant 0 : index
    %c0_10 = arith.constant 0 : index
    %c0_11 = arith.constant 0 : index
    %12 = vector.load %arg10[%c0_9, %c0_10, %c0_11] : memref<1x8x8xf32, #tpu.memory_space<vmem>>, vector<1x8x8xf32>
    %c0_12 = arith.constant 0 : index
    %c0_13 = arith.constant 0 : index
    %c0_14 = arith.constant 0 : index
    %13 = vector.load %arg5[%c0_12, %c0_13, %c0_14] : memref<1x32x32xbf16, #tpu.memory_space<vmem>>, vector<1x32x32xbf16>
    %14 = vector.shape_cast %13 : vector<1x32x32xbf16> to vector<32x32xbf16>
    %15 = vector.extract_strided_slice %11 {offsets = [0, 0], sizes = [8, 8], strides = [1, 1]} : vector<8x96xf32> to vector<8x8xf32>
    %16 = vector.shape_cast %15 : vector<8x8xf32> to vector<1x8x8xf32>
    %17 = vector.extract_strided_slice %11 {offsets = [0, 8], sizes = [8, 8], strides = [1, 1]} : vector<8x96xf32> to vector<8x8xf32>
    %18 = vector.shape_cast %17 : vector<8x8xf32> to vector<1x8x8xf32>
    %19 = vector.extract_strided_slice %11 {offsets = [0, 16], sizes = [8, 8], strides = [1, 1]} : vector<8x96xf32> to vector<8x8xf32>
    %20 = vector.shape_cast %19 : vector<8x8xf32> to vector<1x8x8xf32>
    %21 = arith.truncf %16 : vector<1x8x8xf32> to vector<1x8x8xbf16>
    %22 = arith.truncf %18 : vector<1x8x8xf32> to vector<1x8x8xbf16>
    "tpu.trace_start"() <{level = 10 : i32, message = "bqd,bkd->bqk"}> : () -> ()
    %cst_15 = arith.constant dense<0.000000e+00> : vector<1x8x8xf32>
    %23 = tpu.matmul %21, %22, %cst_15 {dimension_numbers = #tpu.dot_dimension_numbers<[2], [2], [1], [1], [0, 0, 0, 1, 1, 1], [0], [0]>} : vector<1x8x8xbf16>, vector<1x8x8xbf16>, vector<1x8x8xf32> -> vector<1x8x8xf32>
    "tpu.trace_stop"() : () -> ()
    %24 = arith.addf %23, %12 : vector<1x8x8xf32>
    %cst_16 = arith.constant dense<0xFF800000> : vector<1x8xf32>
    %25 = vector.multi_reduction <maximumf>, %24, %cst_16 [2] : vector<1x8x8xf32> to vector<1x8xf32>
    %26 = vector.shape_cast %25 : vector<1x8xf32> to vector<1x8x1xf32>
    %27 = vector.broadcast %26 : vector<1x8x1xf32> to vector<1x8x8xf32>
    %28 = arith.subf %24, %27 : vector<1x8x8xf32>
    %29 = math.exp %28 : vector<1x8x8xf32>
    %cst_17 = arith.constant dense<0.000000e+00> : vector<1x8xf32>
    %30 = vector.multi_reduction <add>, %29, %cst_17 [2] : vector<1x8x8xf32> to vector<1x8xf32>
    %31 = vector.shape_cast %30 : vector<1x8xf32> to vector<1x8x1xf32>
    %32 = tpu.reciprocal %31 {approx = true} : vector<1x8x1xf32> -> vector<1x8x1xf32>
    %33 = vector.broadcast %32 : vector<1x8x1xf32> to vector<1x8x8xf32>
    %34 = arith.mulf %29, %33 : vector<1x8x8xf32>
    %35 = arith.truncf %34 : vector<1x8x8xf32> to vector<1x8x8xbf16>
    %36 = arith.truncf %20 : vector<1x8x8xf32> to vector<1x8x8xbf16>
    "tpu.trace_start"() <{level = 10 : i32, message = "bqk,bkd->bqd"}> : () -> ()
    %cst_18 = arith.constant dense<0.000000e+00> : vector<1x8x8xf32>
    %37 = tpu.matmul %35, %36, %cst_18 {dimension_numbers = #tpu.dot_dimension_numbers<[2], [1], [1], [2], [0, 0, 0, 1, 1, 2], [0], [0]>} : vector<1x8x8xbf16>, vector<1x8x8xbf16>, vector<1x8x8xf32> -> vector<1x8x8xf32>
    "tpu.trace_stop"() : () -> ()
    %38 = vector.shape_cast %37 : vector<1x8x8xf32> to vector<8x8xf32>
    %39 = arith.truncf %38 : vector<8x8xf32> to vector<8x8xbf16>
    %40 = vector.extract_strided_slice %14 {offsets = [0, 0], sizes = [32, 8], strides = [1, 1]} : vector<32x32xbf16> to vector<32x8xbf16>
    %cst_19 = arith.constant dense<0.000000e+00> : vector<8x32xf32>
    %41 = tpu.matmul %39, %40, %cst_19 {dimension_numbers = #tpu.dot_dimension_numbers<[1], [1], [0], [0], [0, 0, 1, 0], [], []>} : vector<8x8xbf16>, vector<32x8xbf16>, vector<8x32xf32> -> vector<8x32xf32>
    %42 = vector.extract_strided_slice %11 {offsets = [0, 24], sizes = [8, 8], strides = [1, 1]} : vector<8x96xf32> to vector<8x8xf32>
    %43 = vector.shape_cast %42 : vector<8x8xf32> to vector<1x8x8xf32>
    %44 = vector.extract_strided_slice %11 {offsets = [0, 32], sizes = [8, 8], strides = [1, 1]} : vector<8x96xf32> to vector<8x8xf32>
    %45 = vector.shape_cast %44 : vector<8x8xf32> to vector<1x8x8xf32>
    %46 = vector.extract_strided_slice %11 {offsets = [0, 40], sizes = [8, 8], strides = [1, 1]} : vector<8x96xf32> to vector<8x8xf32>
    %47 = vector.shape_cast %46 : vector<8x8xf32> to vector<1x8x8xf32>
    %48 = arith.truncf %43 : vector<1x8x8xf32> to vector<1x8x8xbf16>
    %49 = arith.truncf %45 : vector<1x8x8xf32> to vector<1x8x8xbf16>
    "tpu.trace_start"() <{level = 10 : i32, message = "bqd,bkd->bqk"}> : () -> ()
    %cst_20 = arith.constant dense<0.000000e+00> : vector<1x8x8xf32>
    %50 = tpu.matmul %48, %49, %cst_20 {dimension_numbers = #tpu.dot_dimension_numbers<[2], [2], [1], [1], [0, 0, 0, 1, 1, 1], [0], [0]>} : vector<1x8x8xbf16>, vector<1x8x8xbf16>, vector<1x8x8xf32> -> vector<1x8x8xf32>
    "tpu.trace_stop"() : () -> ()
    %51 = arith.addf %50, %12 : vector<1x8x8xf32>
    %cst_21 = arith.constant dense<0xFF800000> : vector<1x8xf32>
    %52 = vector.multi_reduction <maximumf>, %51, %cst_21 [2] : vector<1x8x8xf32> to vector<1x8xf32>
    %53 = vector.shape_cast %52 : vector<1x8xf32> to vector<1x8x1xf32>
    %54 = vector.broadcast %53 : vector<1x8x1xf32> to vector<1x8x8xf32>
    %55 = arith.subf %51, %54 : vector<1x8x8xf32>
    %56 = math.exp %55 : vector<1x8x8xf32>
    %cst_22 = arith.constant dense<0.000000e+00> : vector<1x8xf32>
    %57 = vector.multi_reduction <add>, %56, %cst_22 [2] : vector<1x8x8xf32> to vector<1x8xf32>
    %58 = vector.shape_cast %57 : vector<1x8xf32> to vector<1x8x1xf32>
    %59 = tpu.reciprocal %58 {approx = true} : vector<1x8x1xf32> -> vector<1x8x1xf32>
    %60 = vector.broadcast %59 : vector<1x8x1xf32> to vector<1x8x8xf32>
    %61 = arith.mulf %56, %60 : vector<1x8x8xf32>
    %62 = arith.addf %34, %61 : vector<1x8x8xf32>
    %63 = arith.truncf %61 : vector<1x8x8xf32> to vector<1x8x8xbf16>
    %64 = arith.truncf %47 : vector<1x8x8xf32> to vector<1x8x8xbf16>
    "tpu.trace_start"() <{level = 10 : i32, message = "bqk,bkd->bqd"}> : () -> ()
    %cst_23 = arith.constant dense<0.000000e+00> : vector<1x8x8xf32>
    %65 = tpu.matmul %63, %64, %cst_23 {dimension_numbers = #tpu.dot_dimension_numbers<[2], [1], [1], [2], [0, 0, 0, 1, 1, 2], [0], [0]>} : vector<1x8x8xbf16>, vector<1x8x8xbf16>, vector<1x8x8xf32> -> vector<1x8x8xf32>
    "tpu.trace_stop"() : () -> ()
    %66 = vector.shape_cast %65 : vector<1x8x8xf32> to vector<8x8xf32>
    %67 = arith.truncf %66 : vector<8x8xf32> to vector<8x8xbf16>
    %68 = vector.extract_strided_slice %14 {offsets = [0, 8], sizes = [32, 8], strides = [1, 1]} : vector<32x32xbf16> to vector<32x8xbf16>
    %cst_24 = arith.constant dense<0.000000e+00> : vector<8x32xf32>
    %69 = tpu.matmul %67, %68, %cst_24 {dimension_numbers = #tpu.dot_dimension_numbers<[1], [1], [0], [0], [0, 0, 1, 0], [], []>} : vector<8x8xbf16>, vector<32x8xbf16>, vector<8x32xf32> -> vector<8x32xf32>
    %70 = arith.addf %41, %69 : vector<8x32xf32>
    %71 = vector.extract_strided_slice %11 {offsets = [0, 48], sizes = [8, 8], strides = [1, 1]} : vector<8x96xf32> to vector<8x8xf32>
    %72 = vector.shape_cast %71 : vector<8x8xf32> to vector<1x8x8xf32>
    %73 = vector.extract_strided_slice %11 {offsets = [0, 56], sizes = [8, 8], strides = [1, 1]} : vector<8x96xf32> to vector<8x8xf32>
    %74 = vector.shape_cast %73 : vector<8x8xf32> to vector<1x8x8xf32>
    %75 = vector.extract_strided_slice %11 {offsets = [0, 64], sizes = [8, 8], strides = [1, 1]} : vector<8x96xf32> to vector<8x8xf32>
    %76 = vector.shape_cast %75 : vector<8x8xf32> to vector<1x8x8xf32>
    %77 = arith.truncf %72 : vector<1x8x8xf32> to vector<1x8x8xbf16>
    %78 = arith.truncf %74 : vector<1x8x8xf32> to vector<1x8x8xbf16>
    "tpu.trace_start"() <{level = 10 : i32, message = "bqd,bkd->bqk"}> : () -> ()
    %cst_25 = arith.constant dense<0.000000e+00> : vector<1x8x8xf32>
    %79 = tpu.matmul %77, %78, %cst_25 {dimension_numbers = #tpu.dot_dimension_numbers<[2], [2], [1], [1], [0, 0, 0, 1, 1, 1], [0], [0]>} : vector<1x8x8xbf16>, vector<1x8x8xbf16>, vector<1x8x8xf32> -> vector<1x8x8xf32>
    "tpu.trace_stop"() : () -> ()
    %80 = arith.addf %79, %12 : vector<1x8x8xf32>
    %cst_26 = arith.constant dense<0xFF800000> : vector<1x8xf32>
    %81 = vector.multi_reduction <maximumf>, %80, %cst_26 [2] : vector<1x8x8xf32> to vector<1x8xf32>
    %82 = vector.shape_cast %81 : vector<1x8xf32> to vector<1x8x1xf32>
    %83 = vector.broadcast %82 : vector<1x8x1xf32> to vector<1x8x8xf32>
    %84 = arith.subf %80, %83 : vector<1x8x8xf32>
    %85 = math.exp %84 : vector<1x8x8xf32>
    %cst_27 = arith.constant dense<0.000000e+00> : vector<1x8xf32>
    %86 = vector.multi_reduction <add>, %85, %cst_27 [2] : vector<1x8x8xf32> to vector<1x8xf32>
    %87 = vector.shape_cast %86 : vector<1x8xf32> to vector<1x8x1xf32>
    %88 = tpu.reciprocal %87 {approx = true} : vector<1x8x1xf32> -> vector<1x8x1xf32>
    %89 = vector.broadcast %88 : vector<1x8x1xf32> to vector<1x8x8xf32>
    %90 = arith.mulf %85, %89 : vector<1x8x8xf32>
    %91 = arith.addf %62, %90 : vector<1x8x8xf32>
    %92 = arith.truncf %90 : vector<1x8x8xf32> to vector<1x8x8xbf16>
    %93 = arith.truncf %76 : vector<1x8x8xf32> to vector<1x8x8xbf16>
    "tpu.trace_start"() <{level = 10 : i32, message = "bqk,bkd->bqd"}> : () -> ()
    %cst_28 = arith.constant dense<0.000000e+00> : vector<1x8x8xf32>
    %94 = tpu.matmul %92, %93, %cst_28 {dimension_numbers = #tpu.dot_dimension_numbers<[2], [1], [1], [2], [0, 0, 0, 1, 1, 2], [0], [0]>} : vector<1x8x8xbf16>, vector<1x8x8xbf16>, vector<1x8x8xf32> -> vector<1x8x8xf32>
    "tpu.trace_stop"() : () -> ()
    %95 = vector.shape_cast %94 : vector<1x8x8xf32> to vector<8x8xf32>
    %96 = arith.truncf %95 : vector<8x8xf32> to vector<8x8xbf16>
    %97 = vector.extract_strided_slice %14 {offsets = [0, 16], sizes = [32, 8], strides = [1, 1]} : vector<32x32xbf16> to vector<32x8xbf16>
    %cst_29 = arith.constant dense<0.000000e+00> : vector<8x32xf32>
    %98 = tpu.matmul %96, %97, %cst_29 {dimension_numbers = #tpu.dot_dimension_numbers<[1], [1], [0], [0], [0, 0, 1, 0], [], []>} : vector<8x8xbf16>, vector<32x8xbf16>, vector<8x32xf32> -> vector<8x32xf32>
    %99 = arith.addf %70, %98 : vector<8x32xf32>
    %100 = vector.extract_strided_slice %11 {offsets = [0, 72], sizes = [8, 8], strides = [1, 1]} : vector<8x96xf32> to vector<8x8xf32>
    %101 = vector.shape_cast %100 : vector<8x8xf32> to vector<1x8x8xf32>
    %102 = vector.extract_strided_slice %11 {offsets = [0, 80], sizes = [8, 8], strides = [1, 1]} : vector<8x96xf32> to vector<8x8xf32>
    %103 = vector.shape_cast %102 : vector<8x8xf32> to vector<1x8x8xf32>
    %104 = vector.extract_strided_slice %11 {offsets = [0, 88], sizes = [8, 8], strides = [1, 1]} : vector<8x96xf32> to vector<8x8xf32>
    %105 = vector.shape_cast %104 : vector<8x8xf32> to vector<1x8x8xf32>
    %106 = arith.truncf %101 : vector<1x8x8xf32> to vector<1x8x8xbf16>
    %107 = arith.truncf %103 : vector<1x8x8xf32> to vector<1x8x8xbf16>
    "tpu.trace_start"() <{level = 10 : i32, message = "bqd,bkd->bqk"}> : () -> ()
    %cst_30 = arith.constant dense<0.000000e+00> : vector<1x8x8xf32>
    %108 = tpu.matmul %106, %107, %cst_30 {dimension_numbers = #tpu.dot_dimension_numbers<[2], [2], [1], [1], [0, 0, 0, 1, 1, 1], [0], [0]>} : vector<1x8x8xbf16>, vector<1x8x8xbf16>, vector<1x8x8xf32> -> vector<1x8x8xf32>
    "tpu.trace_stop"() : () -> ()
    %109 = arith.addf %108, %12 : vector<1x8x8xf32>
    %cst_31 = arith.constant dense<0xFF800000> : vector<1x8xf32>
    %110 = vector.multi_reduction <maximumf>, %109, %cst_31 [2] : vector<1x8x8xf32> to vector<1x8xf32>
    %111 = vector.shape_cast %110 : vector<1x8xf32> to vector<1x8x1xf32>
    %112 = vector.broadcast %111 : vector<1x8x1xf32> to vector<1x8x8xf32>
    %113 = arith.subf %109, %112 : vector<1x8x8xf32>
    %114 = math.exp %113 : vector<1x8x8xf32>
    %cst_32 = arith.constant dense<0.000000e+00> : vector<1x8xf32>
    %115 = vector.multi_reduction <add>, %114, %cst_32 [2] : vector<1x8x8xf32> to vector<1x8xf32>
    %116 = vector.shape_cast %115 : vector<1x8xf32> to vector<1x8x1xf32>
    %117 = tpu.reciprocal %116 {approx = true} : vector<1x8x1xf32> -> vector<1x8x1xf32>
    %118 = vector.broadcast %117 : vector<1x8x1xf32> to vector<1x8x8xf32>
    %119 = arith.mulf %114, %118 : vector<1x8x8xf32>
    %120 = arith.addf %91, %119 : vector<1x8x8xf32>
    %121 = arith.truncf %119 : vector<1x8x8xf32> to vector<1x8x8xbf16>
    %122 = arith.truncf %105 : vector<1x8x8xf32> to vector<1x8x8xbf16>
    "tpu.trace_start"() <{level = 10 : i32, message = "bqk,bkd->bqd"}> : () -> ()
    %cst_33 = arith.constant dense<0.000000e+00> : vector<1x8x8xf32>
    %123 = tpu.matmul %121, %122, %cst_33 {dimension_numbers = #tpu.dot_dimension_numbers<[2], [1], [1], [2], [0, 0, 0, 1, 1, 2], [0], [0]>} : vector<1x8x8xbf16>, vector<1x8x8xbf16>, vector<1x8x8xf32> -> vector<1x8x8xf32>
    "tpu.trace_stop"() : () -> ()
    %124 = vector.shape_cast %123 : vector<1x8x8xf32> to vector<8x8xf32>
    %125 = arith.truncf %124 : vector<8x8xf32> to vector<8x8xbf16>
    %126 = vector.extract_strided_slice %14 {offsets = [0, 24], sizes = [32, 8], strides = [1, 1]} : vector<32x32xbf16> to vector<32x8xbf16>
    %cst_34 = arith.constant dense<0.000000e+00> : vector<8x32xf32>
    %127 = tpu.matmul %125, %126, %cst_34 {dimension_numbers = #tpu.dot_dimension_numbers<[1], [1], [0], [0], [0, 0, 1, 0], [], []>} : vector<8x8xbf16>, vector<32x8xbf16>, vector<8x32xf32> -> vector<8x32xf32>
    %128 = arith.addf %99, %127 : vector<8x32xf32>
    %c0_35 = arith.constant 0 : index
    %c0_36 = arith.constant 0 : index
    %c0_37 = arith.constant 0 : index
    %129 = vector.load %arg9[%c0_35, %c0_36, %c0_37] : memref<1x8x8xbf16, #tpu.memory_space<vmem>>, vector<1x8x8xbf16>
    %130 = arith.truncf %120 : vector<1x8x8xf32> to vector<1x8x8xbf16>
    %131 = arith.addf %129, %130 : vector<1x8x8xbf16>
    %c0_38 = arith.constant 0 : index
    %c0_39 = arith.constant 0 : index
    %c0_40 = arith.constant 0 : index
    %132 = vector.load %arg9[%c0_38, %c0_39, %c0_40] : memref<1x8x8xbf16, #tpu.memory_space<vmem>>, vector<1x8x8xbf16>
    tpu.vector_store %arg9[%c0_38, %c0_39, %c0_40], %131 {strides = array<i32>} : memref<1x8x8xbf16, #tpu.memory_space<vmem>>, vector<1x8x8xbf16>,
    %c0_41 = arith.constant 0 : index
    %c0_42 = arith.constant 0 : index
    %c0_43 = arith.constant 0 : index
    %133 = vector.load %arg8[%c0_41, %c0_42, %c0_43] : memref<1x8x32xf32, #tpu.memory_space<vmem>>, vector<1x8x32xf32>
    %134 = vector.shape_cast %128 : vector<8x32xf32> to vector<1x8x32xf32>
    %135 = arith.addf %133, %134 : vector<1x8x32xf32>
    %c0_44 = arith.constant 0 : index
    %c0_45 = arith.constant 0 : index
    %c0_46 = arith.constant 0 : index
    %136 = vector.load %arg8[%c0_44, %c0_45, %c0_46] : memref<1x8x32xf32, #tpu.memory_space<vmem>>, vector<1x8x32xf32>
    tpu.vector_store %arg8[%c0_44, %c0_45, %c0_46], %135 {strides = array<i32>} : memref<1x8x32xf32, #tpu.memory_space<vmem>>, vector<1x8x32xf32>,
    %c0_i32_47 = arith.constant 0 : i32
    %137 = arith.cmpi eq, %arg1, %c0_i32_47 : i32
    %138 = arith.extui %137 : i1 to i32
    %c0_i32_48 = arith.constant 0 : i32
    %139 = arith.cmpi ne, %138, %c0_i32_48 : i32
    scf.if %139 {
      %c0_49 = arith.constant 0 : index
      %c0_50 = arith.constant 0 : index
      %c0_51 = arith.constant 0 : index
      %140 = vector.load %arg9[%c0_49, %c0_50, %c0_51] : memref<1x8x8xbf16, #tpu.memory_space<vmem>>, vector<1x8x8xbf16>
      %141 = arith.extf %140 : vector<1x8x8xbf16> to vector<1x8x8xf32>
      %cst_52 = arith.constant 2.500000e-01 : f32
      %142 = vector.broadcast %cst_52 : f32 to vector<1x8x8xf32>
      %143 = arith.mulf %141, %142 : vector<1x8x8xf32>
      %144 = arith.truncf %143 : vector<1x8x8xf32> to vector<1x8x8xbf16>
      %c0_53 = arith.constant 0 : index
      %c0_54 = arith.constant 0 : index
      %c0_55 = arith.constant 0 : index
      %145 = vector.load %arg9[%c0_53, %c0_54, %c0_55] : memref<1x8x8xbf16, #tpu.memory_space<vmem>>, vector<1x8x8xbf16>
      tpu.vector_store %arg9[%c0_53, %c0_54, %c0_55], %144 {strides = array<i32>} : memref<1x8x8xbf16, #tpu.memory_space<vmem>>, vector<1x8x8xbf16>,
    } else {
    }
    return
  }
  func.func @transform_0(%arg0: i32, %arg1: i32) -> (i32, i32, i32) {
    %c0_i32 = arith.constant 0 : i32
    %c0_i32_0 = arith.constant 0 : i32
    %c0_i32_1 = arith.constant 0 : i32
    return %arg0, %c0_i32, %c0_i32_0 : i32, i32, i32
  }
  func.func @transform_1(%arg0: i32, %arg1: i32) -> (i32, i32, i32) {
    %c0_i32 = arith.constant 0 : i32
    %c0_i32_0 = arith.constant 0 : i32
    %c0_i32_1 = arith.constant 0 : i32
    %c0_i32_2 = arith.constant 0 : i32
    return %c0_i32, %c0_i32_0, %c0_i32_1 : i32, i32, i32
  }
  func.func @transform_2(%arg0: i32, %arg1: i32) -> (i32, i32, i32) {
    %c0_i32 = arith.constant 0 : i32
    %c0_i32_0 = arith.constant 0 : i32
    %c0_i32_1 = arith.constant 0 : i32
    %c0_i32_2 = arith.constant 0 : i32
    return %c0_i32, %c0_i32_0, %c0_i32_1 : i32, i32, i32
  }
  func.func @transform_3(%arg0: i32, %arg1: i32) -> (i32, i32, i32) {
    %c0_i32 = arith.constant 0 : i32
    %c0_i32_0 = arith.constant 0 : i32
    %c0_i32_1 = arith.constant 0 : i32
    %c0_i32_2 = arith.constant 0 : i32
    return %c0_i32, %c0_i32_0, %c0_i32_1 : i32, i32, i32
  }
  func.func @transform_4(%arg0: i32, %arg1: i32) -> (i32, i32) {
    %c0_i32 = arith.constant 0 : i32
    %c0_i32_0 = arith.constant 0 : i32
    %c0_i32_1 = arith.constant 0 : i32
    return %c0_i32, %c0_i32_0 : i32, i32
  }
  func.func @transform_5(%arg0: i32, %arg1: i32) -> (i32, i32, i32) {
    %c0_i32 = arith.constant 0 : i32
    %c0_i32_0 = arith.constant 0 : i32
    %c0_i32_1 = arith.constant 0 : i32
    return %arg0, %c0_i32, %c0_i32_0 : i32, i32, i32
  }
  func.func @transform_6(%arg0: i32, %arg1: i32) -> (i32, i32, i32) {
    %c0_i32 = arith.constant 0 : i32
    %c0_i32_0 = arith.constant 0 : i32
    %c0_i32_1 = arith.constant 0 : i32
    return %arg0, %c0_i32, %c0_i32_0 : i32, i32, i32
  }
  func.func @transform_7(%arg0: i32, %arg1: i32) -> (i32, i32, i32) {
    %c0_i32 = arith.constant 0 : i32
    %c0_i32_0 = arith.constant 0 : i32
    %c0_i32_1 = arith.constant 0 : i32
    return %arg0, %c0_i32, %c0_i32_0 : i32, i32, i32
  }
}

</mosaic_0001>

<llo_original>
// kernel: tpu_custom_call.1
$region0: #{tpu_custom_call.1}
  #allocation0 [shape = 'u32[]', space=smem, size = 0x4, offset = 0x4, fixed_abs, tag = 'smem constant byte address 0x4 - core index']
  #allocation1 [shape = 'u32[72,128]{1,0:T(1,128)}', space=vmem, size = 0x9000, scoped, tag = 'internal scratch']
  #allocation2 [shape = 'f32[1,8,8]{2,1,0:T(8,128)}', space=vmem, size = 0x1000, scoped, tag = 'scratch operand']
  %s0 = inlined_call_operand.vmem [shape: bf16[2,8,32], index: 0, kind: input, shape index: {}]
  %s1 = inlined_call_operand.vmem [shape: bf16[1,96,32], index: 1, kind: input, shape index: {}]
  %s2 = inlined_call_operand.vmem [shape: f32[1,1,96], index: 2, kind: input, shape index: {}]
  %s3 = inlined_call_operand.vmem [shape: bf16[1,32,32], index: 3, kind: input, shape index: {}]
  %s4 = inlined_call_operand.vmem [shape: f32[1,32], index: 4, kind: input, shape index: {}]
  %s5 = inlined_call_operand.vmem [shape: s32[2,1,8], index: 5, kind: input, shape index: {}]
  %s6 = inlined_call_operand.hbm [shape: f32[2,8,32], index: 6, kind: output, shape index: {0}]
  %s7 = inlined_call_operand.hbm [shape: bf16[2,8,8], index: 7, kind: output, shape index: {1}]
  %8 = xla_tuple %s6, %s7
  %s9 = sld [smem:[#allocation0]]
  $region73: #{tpu_custom_call.1} parent=0
    _
  %s11 = ssub.s32 1, %s9
  %s12 = scalar_select 0, %s11, %s9
  $region1: #{tpu_custom_call.1} parent=0
    #allocation3 [shape = 'u8[8192]{0}', space=vmem, size = 0x2000, scoped, tag = 'output window, operand 0']
    #allocation4 [shape = 's32[2]{0}', space=sflag, size = 0x8, scoped, tag = 'scoped memory for tpu_custom_call.1']
    #allocation5 [shape = 'u8[4096]{0}', space=vmem, size = 0x1000, scoped, tag = 'output window, operand 1']
    #allocation6 [shape = 's32[2]{0}', space=sflag, size = 0x8, scoped, tag = 'scoped memory for tpu_custom_call.1']
    %13 = vsyncpa [#allocation4], 0
    %s14 = scalar_lea.sflag [#allocation4], 1
    %15 = vsyncpa %s14, 0
    %16 = vsyncpa [#allocation6], 0
    %s17 = scalar_lea.sflag [#allocation6], 1
    %18 = vsyncpa %s17, 0
    loop: start=0, step=1, limit=4
    $region2: #{tpu_custom_call.1} parent=1 // loop_pre_header
      _
    $region3: #{tpu_custom_call.1} parent=1 // loop_header
      %s20 = sphi 0, %s24
      %p21 = scmp.ge.s32.totalorder %s20, 4
      %s27 = sphi 0, %s39
      %s28 = sphi 0, %s35
      %s29 = sphi 0, %s27
      %s30 = sphi 0, %s28
      %s31 = sphi 0, %s29
      %s32 = sphi 0, %s30
      %s42 = sphi 0, %s44
      %s45 = sphi 0, %s42
      %s46 = sphi 0, %s45
      %s62 = sphi 0, %s46
      %s66 = sphi 0, %s66
      %s68 = sphi 0, %s66
      %s69 = sphi 0, %s68
      %s83 = sphi 0, %s69
      %s87 = sphi 0, %s87
      %s89 = sphi 0, %s87
      %s90 = sphi 0, %s89
      %s104 = sphi 0, %s90
      %s108 = sphi 0, %s108
      %s110 = sphi 0, %s108
      %s111 = sphi 0, %s110
      %s125 = sphi 0, %s111
      %s129 = sphi 0, %s129
      %s131 = sphi 0, %s129
      %s132 = sphi 0, %s131
      %s146 = sphi 0, %s132
      %s152 = sphi 0, %s154
      %s155 = sphi 0, %s152
      %s156 = sphi 0, %s155
      %s172 = sphi 0, %s156
      %s178 = sphi 0, %s180
      %s181 = sphi 0, %s178
      %s182 = sphi 0, %s181
      %s198 = sphi 0, %s182
      %s204 = sphi 0, %s206
      %s207 = sphi 0, %s204
      %s208 = sphi 0, %s207
      %s224 = sphi 0, %s208
    $region4: #{tpu_custom_call.1} parent=1 // loop_header_branch
      %23 = sbr.rel (%p21) target = $region8
    $region5: #{tpu_custom_call.1} parent=1 // loop_body
      %s25 = ssub.s32 %s20, 1
      %s26 = ssub.s32 %s20, 2
      %s33 = sadd.s32 1, %s28
      %p34 = scmp.ge.s32.totalorder %s33, 1
      %s35 = scalar_select %p34, 0, %s33
      %s36 = sadd.s32 1, %s27
      %s37 = scalar_select %p34, %s36, %s27
      %p38 = scmp.ge.s32.totalorder %s37, 2
      %s39 = scalar_select %p38, 0, %s37
      %s40 = ssub.s32 %s27, %s39
      %p41 = scmp.eq.s32.totalorder %s40, 0
      %s43 = sadd.s32 %s42, 1
      %s44 = scalar_select %p41, %s42, %s43
      %p47 = pneg %p41
      %p48 = scmp.eq.s32.totalorder %s20, 1
      %p49 = por %p47, %p48
      %p50 = scmp.ne.s32.totalorder %s42, %s45
      %p51 = scmp.eq.s32.totalorder %s20, 0
      %p52 = por %p50, %p51
      %p53 = scmp.ne.s32.totalorder %s42, %s45
      %p54 = scmp.eq.s32.totalorder %s25, 1
      %p55 = por %p53, %p54
      %p56 = scmp.ne.s32.totalorder %s45, %s46
      %p57 = scmp.eq.s32.totalorder %s25, 0
      %p58 = por %p56, %p57
      %p59 = scmp.ne.s32.totalorder %s45, %s46
      %p60 = scmp.eq.s32.totalorder %s26, 1
      %p61 = por %p59, %p60
      %p63 = scmp.ne.s32.totalorder %s46, %s62
      %p64 = scmp.eq.s32.totalorder %s26, 0
      %p65 = por %p63, %p64
      %s67 = sadd.s32 %s66, 1
      %p70 = scmp.eq.s32.totalorder %s20, 1
      %p71 = scmp.ne.s32.totalorder %s66, %s68
      %p72 = scmp.eq.s32.totalorder %s20, 0
      %p73 = por %p71, %p72
      %p74 = scmp.ne.s32.totalorder %s66, %s68
      %p75 = scmp.eq.s32.totalorder %s25, 1
      %p76 = por %p74, %p75
      %p77 = scmp.ne.s32.totalorder %s68, %s69
      %p78 = scmp.eq.s32.totalorder %s25, 0
      %p79 = por %p77, %p78
      %p80 = scmp.ne.s32.totalorder %s68, %s69
      %p81 = scmp.eq.s32.totalorder %s26, 1
      %p82 = por %p80, %p81
      %p84 = scmp.ne.s32.totalorder %s69, %s83
      %p85 = scmp.eq.s32.totalorder %s26, 0
      %p86 = por %p84, %p85
      %s88 = sadd.s32 %s87, 1
      %p91 = scmp.eq.s32.totalorder %s20, 1
      %p92 = scmp.ne.s32.totalorder %s87, %s89
      %p93 = scmp.eq.s32.totalorder %s20, 0
      %p94 = por %p92, %p93
      %p95 = scmp.ne.s32.totalorder %s87, %s89
      %p96 = scmp.eq.s32.totalorder %s25, 1
      %p97 = por %p95, %p96
      %p98 = scmp.ne.s32.totalorder %s89, %s90
      %p99 = scmp.eq.s32.totalorder %s25, 0
      %p100 = por %p98, %p99
      %p101 = scmp.ne.s32.totalorder %s89, %s90
      %p102 = scmp.eq.s32.totalorder %s26, 1
      %p103 = por %p101, %p102
      %p105 = scmp.ne.s32.totalorder %s90, %s104
      %p106 = scmp.eq.s32.totalorder %s26, 0
      %p107 = por %p105, %p106
      %s109 = sadd.s32 %s108, 1
      %p112 = scmp.eq.s32.totalorder %s20, 1
      %p113 = scmp.ne.s32.totalorder %s108, %s110
      %p114 = scmp.eq.s32.totalorder %s20, 0
      %p115 = por %p113, %p114
      %p116 = scmp.ne.s32.totalorder %s108, %s110
      %p117 = scmp.eq.s32.totalorder %s25, 1
      %p118 = por %p116, %p117
      %p119 = scmp.ne.s32.totalorder %s110, %s111
      %p120 = scmp.eq.s32.totalorder %s25, 0
      %p121 = por %p119, %p120
      %p122 = scmp.ne.s32.totalorder %s110, %s111
      %p123 = scmp.eq.s32.totalorder %s26, 1
      %p124 = por %p122, %p123
      %p126 = scmp.ne.s32.totalorder %s111, %s125
      %p127 = scmp.eq.s32.totalorder %s26, 0
      %p128 = por %p126, %p127
      %s130 = sadd.s32 %s129, 1
      %p133 = scmp.eq.s32.totalorder %s20, 1
      %p134 = scmp.ne.s32.totalorder %s129, %s131
      %p135 = scmp.eq.s32.totalorder %s20, 0
      %p136 = por %p134, %p135
      %p137 = scmp.ne.s32.totalorder %s129, %s131
      %p138 = scmp.eq.s32.totalorder %s25, 1
      %p139 = por %p137, %p138
      %p140 = scmp.ne.s32.totalorder %s131, %s132
      %p141 = scmp.eq.s32.totalorder %s25, 0
      %p142 = por %p140, %p141
      %p143 = scmp.ne.s32.totalorder %s131, %s132
      %p144 = scmp.eq.s32.totalorder %s26, 1
      %p145 = por %p143, %p144
      %p147 = scmp.ne.s32.totalorder %s132, %s146
      %p148 = scmp.eq.s32.totalorder %s26, 0
      %p149 = por %p147, %p148
      %s150 = ssub.s32 %s27, %s39
      %p151 = scmp.eq.s32.totalorder %s150, 0
      %s153 = sadd.s32 %s152, 1
      %s154 = scalar_select %p151, %s152, %s153
      %p157 = pneg %p151
      %p158 = scmp.eq.s32.totalorder %s20, 1
      %p159 = por %p157, %p158
      %p160 = scmp.ne.s32.totalorder %s152, %s155
      %p161 = scmp.eq.s32.totalorder %s20, 0
      %p162 = por %p160, %p161
      %p163 = scmp.ne.s32.totalorder %s152, %s155
      %p164 = scmp.eq.s32.totalorder %s25, 1
      %p165 = por %p163, %p164
      %p166 = scmp.ne.s32.totalorder %s155, %s156
      %p167 = scmp.eq.s32.totalorder %s25, 0
      %p168 = por %p166, %p167
      %p169 = scmp.ne.s32.totalorder %s155, %s156
      %p170 = scmp.eq.s32.totalorder %s26, 1
      %p171 = por %p169, %p170
      %p173 = scmp.ne.s32.totalorder %s156, %s172
      %p174 = scmp.eq.s32.totalorder %s26, 0
      %p175 = por %p173, %p174
      %s176 = ssub.s32 %s27, %s39
      %p177 = scmp.eq.s32.totalorder %s176, 0
      %s179 = sadd.s32 %s178, 1
      %s180 = scalar_select %p177, %s178, %s179
      %p183 = pneg %p177
      %p184 = scmp.eq.s32.totalorder %s20, 1
      %p185 = por %p183, %p184
      %p186 = scmp.ne.s32.totalorder %s178, %s181
      %p187 = scmp.eq.s32.totalorder %s20, 0
      %p188 = por %p186, %p187
      %p189 = scmp.ne.s32.totalorder %s178, %s181
      %p190 = scmp.eq.s32.totalorder %s25, 1
      %p191 = por %p189, %p190
      %p192 = scmp.ne.s32.totalorder %s181, %s182
      %p193 = scmp.eq.s32.totalorder %s25, 0
      %p194 = por %p192, %p193
      %p195 = scmp.ne.s32.totalorder %s181, %s182
      %p196 = scmp.eq.s32.totalorder %s26, 1
      %p197 = por %p195, %p196
      %p199 = scmp.ne.s32.totalorder %s182, %s198
      %p200 = scmp.eq.s32.totalorder %s26, 0
      %p201 = por %p199, %p200
      %s202 = ssub.s32 %s27, %s39
      %p203 = scmp.eq.s32.totalorder %s202, 0
      %s205 = sadd.s32 %s204, 1
      %s206 = scalar_select %p203, %s204, %s205
      %p209 = pneg %p203
      %p210 = scmp.eq.s32.totalorder %s20, 1
      %p211 = por %p209, %p210
      %p212 = scmp.ne.s32.totalorder %s204, %s207
      %p213 = scmp.eq.s32.totalorder %s20, 0
      %p214 = por %p212, %p213
      %p215 = scmp.ne.s32.totalorder %s204, %s207
      %p216 = scmp.eq.s32.totalorder %s25, 1
      %p217 = por %p215, %p216
      %p218 = scmp.ne.s32.totalorder %s207, %s208
      %p219 = scmp.eq.s32.totalorder %s25, 0
      %p220 = por %p218, %p219
      %p221 = scmp.ne.s32.totalorder %s207, %s208
      %p222 = scmp.eq.s32.totalorder %s26, 1
      %p223 = por %p221, %p222
      %p225 = scmp.ne.s32.totalorder %s208, %s224
      %p226 = scmp.eq.s32.totalorder %s26, 0
      %p227 = por %p225, %p226
      %p228 = scmp.le.s32.totalorder 1, %s20
      %p229 = scmp.lt.s32.totalorder %s20, 3
      %p230 = pnand %p228, %p229
      %p231 = pneg %p230
      // Predicated region
      $region9: #{tpu_custom_call.1} parent=5 // pred_check
        _
      $region10: #{tpu_custom_call.1} parent=5 // pred_check_branch
        %233 = sbr.rel (%p230) target = $region12
      $region11: #{tpu_custom_call.1} parent=5 // pred_region
        %s234 = ssub.s32 %s20, 1
        // Predicated region
        $region13: #{tpu_custom_call.1} parent=11 // pred_check
          %p235 = pneg %p79
        $region14: #{tpu_custom_call.1} parent=11 // pred_check_branch
          %237 = sbr.rel (%p235) target = $region16
        $region15: #{tpu_custom_call.1} parent=11 // pred_region
          _
        $region16: #{tpu_custom_call.1} parent=11 // pred_fallthru
          _
        // Predicated region
        $region17: #{tpu_custom_call.1} parent=11 // pred_check
          %p238 = pneg %p100
        $region18: #{tpu_custom_call.1} parent=11 // pred_check_branch
          %240 = sbr.rel (%p238) target = $region20
        $region19: #{tpu_custom_call.1} parent=11 // pred_region
          _
        $region20: #{tpu_custom_call.1} parent=11 // pred_fallthru
          _
        // Predicated region
        $region21: #{tpu_custom_call.1} parent=11 // pred_check
          %p241 = pneg %p121
        $region22: #{tpu_custom_call.1} parent=11 // pred_check_branch
          %243 = sbr.rel (%p241) target = $region24
        $region23: #{tpu_custom_call.1} parent=11 // pred_region
          _
        $region24: #{tpu_custom_call.1} parent=11 // pred_fallthru
          _
        // Predicated region
        $region25: #{tpu_custom_call.1} parent=11 // pred_check
          %p244 = pneg %p142
        $region26: #{tpu_custom_call.1} parent=11 // pred_check_branch
          %246 = sbr.rel (%p244) target = $region28
        $region27: #{tpu_custom_call.1} parent=11 // pred_region
          _
        $region28: #{tpu_custom_call.1} parent=11 // pred_fallthru
          _
      $region12: #{tpu_custom_call.1} parent=5 // pred_fallthru
        _
      %p247 = scmp.lt.s32.totalorder %s20, 2
      // Predicated region
      $region29: #{tpu_custom_call.1} parent=5 // pred_check
        %p248 = pneg %p247
      $region30: #{tpu_custom_call.1} parent=5 // pred_check_branch
        %250 = sbr.rel (%p248) target = $region32
      $region31: #{tpu_custom_call.1} parent=5 // pred_region
        // Predicated region
        $region33: #{tpu_custom_call.1} parent=31 // pred_check
          %p251 = pneg %p52
        $region34: #{tpu_custom_call.1} parent=31 // pred_check_branch
          %253 = sbr.rel (%p251) target = $region36
        $region35: #{tpu_custom_call.1} parent=31 // pred_region
          %p254 = scmp.lt.s32.totalorder %s27, 1
          %s255 = scalar_select %p254, %s27, 1
          %s256 = smul.addr %s255, 4
          %s257 = scalar_lea.vmem %s0, %s256
        $region36: #{tpu_custom_call.1} parent=31 // pred_fallthru
          _
        // Predicated region
        $region37: #{tpu_custom_call.1} parent=31 // pred_check
          %p258 = pneg %p162
        $region38: #{tpu_custom_call.1} parent=31 // pred_check_branch
          %260 = sbr.rel (%p258) target = $region40
        $region39: #{tpu_custom_call.1} parent=31 // pred_region
          %p261 = scmp.lt.s32.totalorder %s27, 1
          %s262 = scalar_select %p261, %s27, 1
          %s263 = scalar_lea.vmem %s5, %s262
        $region40: #{tpu_custom_call.1} parent=31 // pred_fallthru
          _
      $region32: #{tpu_custom_call.1} parent=5 // pred_fallthru
        _
      %p264 = scmp.le.s32.totalorder 1, %s20
      %p265 = scmp.lt.s32.totalorder %s20, 3
      %p266 = pnand %p264, %p265
      %p267 = pneg %p266
      // Predicated region
      $region41: #{tpu_custom_call.1} parent=5 // pred_check
        _
      $region42: #{tpu_custom_call.1} parent=5 // pred_check_branch
        %269 = sbr.rel (%p266) target = $region44
      $region43: #{tpu_custom_call.1} parent=5 // pred_region
        %s270 = ssub.s32 %s20, 1
        %p271 = scmp.lt.s32.totalorder %s29, 1
        %s272 = scalar_select %p271, %s29, 1
        %s273 = smul.addr %s272, 4
        %s274 = scalar_lea.vmem %s0, %s273
        %p275 = pneg %p58
        %p276 = pneg %p55
        %p277 = pneg %p79
        %p278 = pneg %p76
        %p279 = pneg %p100
        %p280 = pneg %p97
        %p281 = pneg %p121
        %p282 = pneg %p118
        %p283 = pneg %p142
        %p284 = pneg %p139
        %p285 = scmp.lt.s32.totalorder %s29, 1
        %s286 = scalar_select %p285, %s29, 1
        %s287 = scalar_lea.vmem %s5, %s286
        %p288 = pneg %p168
        %p289 = pneg %p165
        %p290 = pneg %p194
        %p291 = pneg %p191
        %s292 = sand.u32 %s181, 1
        %s293 = scalar_lea.sflag [#allocation4], %s292
        %s294 = sand.u32 %s181, 1
        %s295 = smul.addr %s294, 8
        %s296 = scalar_lea.vmem [#allocation3], %s295
        %p297 = pneg %p220
        %p298 = pneg %p217
        %s299 = sand.u32 %s207, 1
        %s300 = scalar_lea.sflag [#allocation6], %s299
        %s301 = sand.u32 %s207, 1
        %s302 = smul.addr %s301, 4
        %s303 = scalar_lea.vmem [#allocation5], %s302
        %p304 = scmp.lt.s32.totalorder %s29, 1
        %s305 = scalar_select %p304, %s29, 1
        %s306 = smul.addr %s305, 4
        %s307 = scalar_lea.vmem %s0, %s306
        %p308 = scmp.lt.s32.totalorder %s29, 1
        %s309 = scalar_select %p308, %s29, 1
        %s310 = scalar_lea.vmem %s5, %s309
        %p312 = scmp.eq.s32.totalorder %s30, 0
        // Predicated region
        $region45: #{tpu_custom_call.1} parent=43 // pred_check
          %p313 = pneg %p312
        $region46: #{tpu_custom_call.1} parent=43 // pred_check_branch
          %315 = sbr.rel (%p313) target = $region48
        $region47: #{tpu_custom_call.1} parent=43 // pred_region
          %v316 = vlaneseq
          %v317 = vshrl.u32 %v316, 7
          %v318 = vlaneseq
          %v319 = vand.u32 %v318, 127
          %vm320 = vcmp.le.s32.totalorder %v319, %v317
          %v321 = vld [vmem:[%s310] sm:$0x1]
          %vm322 = vcmp.ne.s32.totalorder %v321, 0
          %v323 = vsel %vm322, 1, 0
          %v324 = vperm.slane %v323, 0
          %vm325 = vcmp.eq.s32.totalorder %v324, 1
          %vm326 = vmand %vm320, %vm325
          %v327 = vsel %vm326, 0.0, -inf
          %vm328 = vcmask 64512
          %329 = vst.msk [vmem:[#allocation2] sm:$0xff] %vm328, %v327
          %v330 = vld [vmem:[%s4] sm:$0x1]
          %v332 = vperm.slane %v330, 0
          %vm334 = vcmask 261120
          %335 = vst.msk [vmem:[%s296] sm:$0xff] %vm334, %v332
          %vm336 = vcmask 60416
          %337 = vst.msk [vmem:[%s303] sm:$0xf] %vm336, 0
        $region48: #{tpu_custom_call.1} parent=43 // pred_fallthru
          _
        %v338 = vld [vmem:[%s307] sm:$0xf]
        %v339 = vld [vmem:[%s1] sm:$0xf]
        %v340 = vld [vmem:[%s1 + $0x4] sm:$0xf]
        %v341 = vld [vmem:[%s1 + $0x8] sm:$0xf]
        %v342 = vld [vmem:[%s1 + $0xc] sm:$0xf]
        %v343 = vld [vmem:[%s1 + $0x10] sm:$0xf]
        %v344 = vld [vmem:[%s1 + $0x14] sm:$0xf]
        %v345 = vld [vmem:[%s1 + $0x18] sm:$0xf]
        %v346 = vld [vmem:[%s1 + $0x1c] sm:$0xf]
        %v347 = vld [vmem:[%s1 + $0x20] sm:$0xf]
        %v348 = vld [vmem:[%s1 + $0x24] sm:$0xf]
        %v349 = vld [vmem:[%s1 + $0x28] sm:$0xf]
        %v350 = vld [vmem:[%s1 + $0x2c] sm:$0xf]
        %v351 = vld [vmem:[%s2] sm:$0x1]
        %v353 = vperm.slane %v351, 0
        %v367 = vunpack.c.l.b16 %v339
        %v368 = vunpack.c.l.b16 %v340
        %v369 = vunpack.c.l.b16 %v341
        %v370 = vunpack.c.l.b16 %v342
        %v371 = vunpack.c.l.b16 %v343
        %v372 = vunpack.c.l.b16 %v344
        %v373 = vunpack.c.l.b16 %v345
        %v374 = vunpack.c.l.b16 %v346
        %v375 = vunpack.c.l.b16 %v347
        %v376 = vunpack.c.l.b16 %v348
        %v377 = vunpack.c.l.b16 %v349
        %v378 = vunpack.c.l.b16 %v350
        %v379 = vpack.c.b16 %v368, %v367
        %v380 = vpack.c.b16 %v370, %v369
        %v381 = vpack.c.b16 %v372, %v371
        %v382 = vpack.c.b16 %v374, %v373
        %v383 = vpack.c.b16 %v376, %v375
        %v384 = vpack.c.b16 %v378, %v377
        %vm385 = vcmask 261120
        %v387 = vsel %vm385, %v338, 0
        %v390 = vsel %vm385, %v379, 0
        %v393 = vsel %vm385, %v380, 0
        %v396 = vsel %vm385, %v381, 0
        %v399 = vsel %vm385, %v382, 0
        %v402 = vsel %vm385, %v383, 0
        %v405 = vsel %vm385, %v384, 0
        %407 = vmatpush.bf16.xpose.msra.mxu0 0
        %408 = vmatpush.bf16.xpose.msra.mxu0 0
        %409 = vmatpush.bf16.xpose.msra.mxu0 %v405
        %410 = vmatpush.bf16.xpose.msra.mxu0 %v402
        %411 = vmatpush.bf16.xpose.msra.mxu0 %v399
        %412 = vmatpush.bf16.xpose.msra.mxu0 %v396
        %413 = vmatpush.bf16.xpose.msra.mxu0 %v393
        %414 = vmatpush.bf16.xpose.msra.mxu0 %v390
        %415 = vmatmul.bf16.gmra.mxu0 %v387
        %v416 = vpop.f32.mrf.mxu0
        %v417 = vadd.f32 %v353, %v416
        %v418 = vpop.f32.mrf.mxu0
        %419 = vdwg.mxu0
        %v420 = vld [vmem:[#allocation2] sm:$0xff]
        %v421 = vld [vmem:[%s3] sm:$0xf]
        %v422 = vld [vmem:[%s3 + $0x4] sm:$0xf]
        %v423 = vld [vmem:[%s3 + $0x8] sm:$0xf]
        %v424 = vld [vmem:[%s3 + $0xc] sm:$0xf]
        %v425 = vpack.c.bf16 %v417, %v417
        %v427 = vunpack.c.l.b16 %v425
        %v428 = vpack.c.b16 %v427, %v427
        %429 = vrot.lane.b32.xlu0 %v428, 120
        %v430 = vpop.permute.xlu0 %429
        %vm431 = vcmask 64512
        %v433 = vsel %vm431, %v425, 0
        %v436 = vsel %vm431, %v430, 0
        %438 = vmatpush.bf16.xpose.msra.mxu0 0
        %439 = vmatpush.bf16.xpose.msra.mxu0 0
        %440 = vmatpush.bf16.xpose.msra.mxu0 0
        %441 = vmatpush.bf16.xpose.msra.mxu0 0
        %442 = vmatpush.bf16.xpose.msra.mxu0 0
        %443 = vmatpush.bf16.xpose.msra.mxu0 0
        %444 = vmatpush.bf16.xpose.msra.mxu0 0
        %445 = vmatpush.bf16.xpose.msra.mxu0 %v436
        %446 = vmatmul.bf16.gmra.mxu0 %v433
        %v447 = vpop.f32.mrf.mxu0
        %v448 = vadd.f32 %v420, %v447
        %v449 = vpop.f32.mrf.mxu0
        %450 = vdwg.mxu0
        %v451 = vsel %vm431, %v448, -inf
        %452 = vmax.xlane.f32.xlu0 %v451
        %v453 = vpop.xlane.xlu0 %452
        %v454 = vsub.f32 %v448, %v453
        %v455 = vmul.f32 %v454, 1.442695
        %v456 = vpow.pop %v455
        %v457 = vsel %vm431, %v456, 0.0
        %458 = vadd.xlane.f32.xlu0 %v457
        %v459 = vpop.xlane.xlu0 %458
        %v460 = vrcp.pop %v459
        %v461 = vmul.f32 %v456, %v460
        %v462 = vpack.c.bf16 %v461, %v461
        %463 = vrot.lane.b32.xlu0 %v428, 112
        %v464 = vpop.permute.xlu0 %463
        %v466 = vsel %vm431, %v462, 0
        %vm468 = vcmask 1043456
        %v470 = vsel %vm468, %v464, 0
        %472 = vmatpush.bf16.msra.mxu0 0
        %473 = vmatpush.bf16.msra.mxu0 0
        %474 = vmatpush.bf16.msra.mxu0 0
        %475 = vmatpush.bf16.msra.mxu0 0
        %476 = vmatpush.bf16.msra.mxu0 0
        %477 = vmatpush.bf16.msra.mxu0 0
        %478 = vmatpush.bf16.msra.mxu0 0
        %479 = vmatpush.bf16.msra.mxu0 %v470
        %480 = vmatmul.bf16.gmra.mxu0 %v466
        %v481 = vpop.f32.mrf.mxu0
        %v482 = vadd.f32 0.0, %v481
        %v483 = vpop.f32.mrf.mxu0
        %484 = vdwg.mxu0
        %v485 = vpack.c.bf16 %v482, %v482
        %486 = vrot.lane.b32.xlu0 %v428, 104
        %v487 = vpop.permute.xlu0 %486
        %488 = vrot.lane.b32.xlu0 %v428, 96
        %v489 = vpop.permute.xlu0 %488
        %v491 = vsel %vm431, %v487, 0
        %v494 = vsel %vm431, %v489, 0
        %496 = vmatpush.bf16.xpose.msra.mxu0 0
        %497 = vmatpush.bf16.xpose.msra.mxu0 0
        %498 = vmatpush.bf16.xpose.msra.mxu0 0
        %499 = vmatpush.bf16.xpose.msra.mxu0 0
        %500 = vmatpush.bf16.xpose.msra.mxu0 0
        %501 = vmatpush.bf16.xpose.msra.mxu0 0
        %502 = vmatpush.bf16.xpose.msra.mxu0 0
        %503 = vmatpush.bf16.xpose.msra.mxu0 %v494
        %504 = vmatmul.bf16.gmra.mxu0 %v491
        %v505 = vpop.f32.mrf.mxu0
        %v506 = vadd.f32 %v420, %v505
        %v507 = vpop.f32.mrf.mxu0
        %508 = vdwg.mxu0
        %v509 = vsel %vm431, %v506, -inf
        %510 = vmax.xlane.f32.xlu0 %v509
        %v511 = vpop.xlane.xlu0 %510
        %v512 = vsub.f32 %v506, %v511
        %v513 = vmul.f32 %v512, 1.442695
        %v514 = vpow.pop %v513
        %v515 = vsel %vm431, %v514, 0.0
        %516 = vadd.xlane.f32.xlu0 %v515
        %v517 = vpop.xlane.xlu0 %516
        %v518 = vrcp.pop %v517
        %v519 = vmul.f32 %v514, %v518
        %v520 = vadd.f32 %v461, %v519
        %v521 = vpack.c.bf16 %v519, %v519
        %522 = vrot.lane.b32.xlu0 %v428, 88
        %v523 = vpop.permute.xlu0 %522
        %v525 = vsel %vm431, %v521, 0
        %v528 = vsel %vm468, %v523, 0
        %530 = vmatpush.bf16.msra.mxu0 0
        %531 = vmatpush.bf16.msra.mxu0 0
        %532 = vmatpush.bf16.msra.mxu0 0
        %533 = vmatpush.bf16.msra.mxu0 0
        %534 = vmatpush.bf16.msra.mxu0 0
        %535 = vmatpush.bf16.msra.mxu0 0
        %536 = vmatpush.bf16.msra.mxu0 0
        %537 = vmatpush.bf16.msra.mxu0 %v528
        %538 = vmatmul.bf16.gmra.mxu0 %v525
        %v539 = vpop.f32.mrf.mxu0
        %v540 = vadd.f32 0.0, %v539
        %v541 = vpop.f32.mrf.mxu0
        %542 = vdwg.mxu0
        %v543 = vpack.c.bf16 %v540, %v540
        %v548 = vunpack.c.l.b16 %v421
        %v549 = vunpack.c.l.b16 %v422
        %v550 = vunpack.c.l.b16 %v423
        %v551 = vunpack.c.l.b16 %v424
        %v552 = vpack.c.b16 %v549, %v548
        %v553 = vpack.c.b16 %v551, %v550
        %554 = vrot.lane.b32.xlu0 %v552, 120
        %v555 = vpop.permute.xlu0 %554
        %556 = vrot.lane.b32.xlu0 %v553, 120
        %v557 = vpop.permute.xlu0 %556
        %v559 = vsel %vm431, %v543, 0
        %v562 = vsel %vm431, %v555, 0
        %v565 = vsel %vm431, %v557, 0
        %567 = vmatpush.bf16.xpose.msra.mxu0 0
        %568 = vmatpush.bf16.xpose.msra.mxu0 0
        %569 = vmatpush.bf16.xpose.msra.mxu0 0
        %570 = vmatpush.bf16.xpose.msra.mxu0 0
        %571 = vmatpush.bf16.xpose.msra.mxu0 0
        %572 = vmatpush.bf16.xpose.msra.mxu0 0
        %573 = vmatpush.bf16.xpose.msra.mxu0 %v565
        %574 = vmatpush.bf16.xpose.msra.mxu0 %v562
        %575 = vmatmul.bf16.gmra.mxu0 %v559
        %v576 = vpop.f32.mrf.mxu0
        %v577 = vadd.f32 0.0, %v576
        %v578 = vpop.f32.mrf.mxu0
        %579 = vdwg.mxu0
        %v581 = vsel %vm431, %v485, 0
        %v584 = vsel %vm431, %v552, 0
        %v587 = vsel %vm431, %v553, 0
        %589 = vmatpush.bf16.xpose.msra.mxu0 0
        %590 = vmatpush.bf16.xpose.msra.mxu0 0
        %591 = vmatpush.bf16.xpose.msra.mxu0 0
        %592 = vmatpush.bf16.xpose.msra.mxu0 0
        %593 = vmatpush.bf16.xpose.msra.mxu0 0
        %594 = vmatpush.bf16.xpose.msra.mxu0 0
        %595 = vmatpush.bf16.xpose.msra.mxu0 %v587
        %596 = vmatpush.bf16.xpose.msra.mxu0 %v584
        %597 = vmatmul.bf16.gmra.mxu0 %v581
        %v598 = vpop.f32.mrf.mxu0
        %v599 = vadd.f32 %v577, %v598
        %v600 = vpop.f32.mrf.mxu0
        %601 = vdwg.mxu0
        %602 = vrot.lane.b32.xlu0 %v428, 80
        %v603 = vpop.permute.xlu0 %602
        %604 = vrot.lane.b32.xlu0 %v428, 72
        %v605 = vpop.permute.xlu0 %604
        %v607 = vsel %vm431, %v603, 0
        %v610 = vsel %vm431, %v605, 0
        %612 = vmatpush.bf16.xpose.msra.mxu0 0
        %613 = vmatpush.bf16.xpose.msra.mxu0 0
        %614 = vmatpush.bf16.xpose.msra.mxu0 0
        %615 = vmatpush.bf16.xpose.msra.mxu0 0
        %616 = vmatpush.bf16.xpose.msra.mxu0 0
        %617 = vmatpush.bf16.xpose.msra.mxu0 0
        %618 = vmatpush.bf16.xpose.msra.mxu0 0
        %619 = vmatpush.bf16.xpose.msra.mxu0 %v610
        %620 = vmatmul.bf16.gmra.mxu0 %v607
        %v621 = vpop.f32.mrf.mxu0
        %v622 = vadd.f32 %v420, %v621
        %v623 = vpop.f32.mrf.mxu0
        %624 = vdwg.mxu0
        %v625 = vsel %vm431, %v622, -inf
        %626 = vmax.xlane.f32.xlu0 %v625
        %v627 = vpop.xlane.xlu0 %626
        %v628 = vsub.f32 %v622, %v627
        %v629 = vmul.f32 %v628, 1.442695
        %v630 = vpow.pop %v629
        %v631 = vsel %vm431, %v630, 0.0
        %632 = vadd.xlane.f32.xlu0 %v631
        %v633 = vpop.xlane.xlu0 %632
        %v634 = vrcp.pop %v633
        %v635 = vmul.f32 %v630, %v634
        %v636 = vadd.f32 %v520, %v635
        %v637 = vpack.c.bf16 %v635, %v635
        %638 = vrot.lane.b32.xlu0 %v428, 64
        %v639 = vpop.permute.xlu0 %638
        %v641 = vsel %vm431, %v637, 0
        %v644 = vsel %vm468, %v639, 0
        %646 = vmatpush.bf16.msra.mxu0 0
        %647 = vmatpush.bf16.msra.mxu0 0
        %648 = vmatpush.bf16.msra.mxu0 0
        %649 = vmatpush.bf16.msra.mxu0 0
        %650 = vmatpush.bf16.msra.mxu0 0
        %651 = vmatpush.bf16.msra.mxu0 0
        %652 = vmatpush.bf16.msra.mxu0 0
        %653 = vmatpush.bf16.msra.mxu0 %v644
        %654 = vmatmul.bf16.gmra.mxu0 %v641
        %v655 = vpop.f32.mrf.mxu0
        %v656 = vadd.f32 0.0, %v655
        %v657 = vpop.f32.mrf.mxu0
        %658 = vdwg.mxu0
        %v659 = vpack.c.bf16 %v656, %v656
        %660 = vrot.lane.b32.xlu0 %v552, 112
        %v661 = vpop.permute.xlu0 %660
        %662 = vrot.lane.b32.xlu0 %v553, 112
        %v663 = vpop.permute.xlu0 %662
        %v665 = vsel %vm431, %v659, 0
        %v668 = vsel %vm431, %v661, 0
        %v671 = vsel %vm431, %v663, 0
        %673 = vmatpush.bf16.xpose.msra.mxu0 0
        %674 = vmatpush.bf16.xpose.msra.mxu0 0
        %675 = vmatpush.bf16.xpose.msra.mxu0 0
        %676 = vmatpush.bf16.xpose.msra.mxu0 0
        %677 = vmatpush.bf16.xpose.msra.mxu0 0
        %678 = vmatpush.bf16.xpose.msra.mxu0 0
        %679 = vmatpush.bf16.xpose.msra.mxu0 %v671
        %680 = vmatpush.bf16.xpose.msra.mxu0 %v668
        %681 = vmatmul.bf16.gmra.mxu0 %v665
        %v682 = vpop.f32.mrf.mxu0
        %v683 = vadd.f32 0.0, %v682
        %v684 = vpop.f32.mrf.mxu0
        %685 = vdwg.mxu0
        %v686 = vadd.f32 %v599, %v683
        %687 = vrot.lane.b32.xlu0 %v428, 56
        %v688 = vpop.permute.xlu0 %687
        %689 = vrot.lane.b32.xlu0 %v428, 48
        %v690 = vpop.permute.xlu0 %689
        %v692 = vsel %vm431, %v688, 0
        %v695 = vsel %vm431, %v690, 0
        %697 = vmatpush.bf16.xpose.msra.mxu0 0
        %698 = vmatpush.bf16.xpose.msra.mxu0 0
        %699 = vmatpush.bf16.xpose.msra.mxu0 0
        %700 = vmatpush.bf16.xpose.msra.mxu0 0
        %701 = vmatpush.bf16.xpose.msra.mxu0 0
        %702 = vmatpush.bf16.xpose.msra.mxu0 0
        %703 = vmatpush.bf16.xpose.msra.mxu0 0
        %704 = vmatpush.bf16.xpose.msra.mxu0 %v695
        %705 = vmatmul.bf16.gmra.mxu0 %v692
        %v706 = vpop.f32.mrf.mxu0
        %v707 = vadd.f32 %v420, %v706
        %v708 = vpop.f32.mrf.mxu0
        %709 = vdwg.mxu0
        %v710 = vsel %vm431, %v707, -inf
        %711 = vmax.xlane.f32.xlu0 %v710
        %v712 = vpop.xlane.xlu0 %711
        %v713 = vsub.f32 %v707, %v712
        %v714 = vmul.f32 %v713, 1.442695
        %v715 = vpow.pop %v714
        %v716 = vsel %vm431, %v715, 0.0
        %717 = vadd.xlane.f32.xlu0 %v716
        %v718 = vpop.xlane.xlu0 %717
        %v719 = vrcp.pop %v718
        %v720 = vmul.f32 %v715, %v719
        %v721 = vadd.f32 %v636, %v720
        %v722 = vpack.c.bf16 %v720, %v720
        %723 = vrot.lane.b32.xlu0 %v428, 40
        %v724 = vpop.permute.xlu0 %723
        %v726 = vsel %vm431, %v722, 0
        %v729 = vsel %vm468, %v724, 0
        %731 = vmatpush.bf16.msra.mxu0 0
        %732 = vmatpush.bf16.msra.mxu0 0
        %733 = vmatpush.bf16.msra.mxu0 0
        %734 = vmatpush.bf16.msra.mxu0 0
        %735 = vmatpush.bf16.msra.mxu0 0
        %736 = vmatpush.bf16.msra.mxu0 0
        %737 = vmatpush.bf16.msra.mxu0 0
        %738 = vmatpush.bf16.msra.mxu0 %v729
        %739 = vmatmul.bf16.gmra.mxu0 %v726
        %v740 = vpop.f32.mrf.mxu0
        %v741 = vadd.f32 0.0, %v740
        %v742 = vpop.f32.mrf.mxu0
        %743 = vdwg.mxu0
        %v744 = vpack.c.bf16 %v741, %v741
        %745 = vrot.lane.b32.xlu0 %v552, 104
        %v746 = vpop.permute.xlu0 %745
        %747 = vrot.lane.b32.xlu0 %v553, 104
        %v748 = vpop.permute.xlu0 %747
        %v750 = vsel %vm431, %v744, 0
        %v753 = vsel %vm431, %v746, 0
        %v756 = vsel %vm431, %v748, 0
        %758 = vmatpush.bf16.xpose.msra.mxu0 0
        %759 = vmatpush.bf16.xpose.msra.mxu0 0
        %760 = vmatpush.bf16.xpose.msra.mxu0 0
        %761 = vmatpush.bf16.xpose.msra.mxu0 0
        %762 = vmatpush.bf16.xpose.msra.mxu0 0
        %763 = vmatpush.bf16.xpose.msra.mxu0 0
        %764 = vmatpush.bf16.xpose.msra.mxu0 %v756
        %765 = vmatpush.bf16.xpose.msra.mxu0 %v753
        %766 = vmatmul.bf16.gmra.mxu0 %v750
        %v767 = vpop.f32.mrf.mxu0
        %v768 = vadd.f32 0.0, %v767
        %v769 = vpop.f32.mrf.mxu0
        %770 = vdwg.mxu0
        %v771 = vadd.f32 %v686, %v768
        %v772 = vld [vmem:[%s303] sm:$0xf]
        %v773 = vpack.c.bf16 %v721, %v721
        %v774 = vunpack.c.l.bf16 %v772
        %v775 = vunpack.c.l.bf16 %v773
        %v776 = vadd.f32 %v774, %v775
        %v777 = vpack.c.bf16 %v776, %v776
        %vm778 = vcmask 60416
        %779 = vst.msk [vmem:[%s303] sm:$0xf] %vm778, %v777
        %v780 = vld [vmem:[%s296] sm:$0xff]
        %v781 = vadd.f32 %v780, %v771
        %782 = vst.msk [vmem:[%s296] sm:$0xff] %vm385, %v781
        // Predicated region
        $region49: #{tpu_custom_call.1} parent=43 // pred_check
          %p783 = pneg %p312
        $region50: #{tpu_custom_call.1} parent=43 // pred_check_branch
          %785 = sbr.rel (%p783) target = $region52
        $region51: #{tpu_custom_call.1} parent=43 // pred_region
          %v786 = vld [vmem:[%s303] sm:$0xf]
          %v787 = vunpack.c.l.bf16 %v786
          %v788 = vmul.f32 %v787, 0.25
          %v789 = vpack.c.bf16 %v788, %v788
          %790 = vst.msk [vmem:[%s303] sm:$0xf] %vm778, %v789
        $region52: #{tpu_custom_call.1} parent=43 // pred_fallthru
          _
        %s791 = sand.u32 %s181, 1
        %s792 = scalar_lea.sflag [#allocation4], %s791
        %s793 = sand.u32 %s181, 1
        %s794 = smul.addr %s793, 8
        %s795 = scalar_lea.vmem [#allocation3], %s794
        %s796 = sand.u32 %s207, 1
        %s797 = scalar_lea.sflag [#allocation6], %s796
        %s798 = sand.u32 %s207, 1
        %s799 = smul.addr %s798, 4
        %s800 = scalar_lea.vmem [#allocation5], %s799
        // Predicated region
        $region53: #{tpu_custom_call.1} parent=43 // pred_check
          %p801 = pneg %p191
        $region54: #{tpu_custom_call.1} parent=43 // pred_check_branch
          %803 = sbr.rel (%p801) target = $region56
        $region55: #{tpu_custom_call.1} parent=43 // pred_region
          %805 = vsyncadd %s792, 0
          %s806 = smul.addr %s29, 8
          %s807 = scalar_lea.hbm %s6, %s806
          %s809 = sshll.u32 %s795, 4
          %s810 = int_to_ptr.vmem [resolvable:$true] %s809
          %s811 = sshll.u32 %s807, 4
          %s812 = int_to_ptr.hbm [resolvable:$true] %s811
          %814 = dma.vmem_to_hbm [thread:$0]  %s810, 128, %s812, %s792
        $region56: #{tpu_custom_call.1} parent=43 // pred_fallthru
          _
        // Predicated region
        $region57: #{tpu_custom_call.1} parent=43 // pred_check
          %p815 = pneg %p217
        $region58: #{tpu_custom_call.1} parent=43 // pred_check_branch
          %817 = sbr.rel (%p815) target = $region60
        $region59: #{tpu_custom_call.1} parent=43 // pred_region
          %819 = vsyncadd %s797, 0
          %s820 = smul.addr %s29, 4
          %s821 = scalar_lea.hbm %s7, %s820
          %s823 = sshll.u32 %s800, 4
          %s824 = int_to_ptr.vmem [resolvable:$true] %s823
          %s825 = sshll.u32 %s821, 4
          %s826 = int_to_ptr.hbm [resolvable:$true] %s825
          %828 = dma.vmem_to_hbm [thread:$0]  %s824, 64, %s826, %s797
        $region60: #{tpu_custom_call.1} parent=43 // pred_fallthru
          _
      $region44: #{tpu_custom_call.1} parent=5 // pred_fallthru
        _
      %p829 = scmp.le.s32.totalorder 2, %s20
      // Predicated region
      $region61: #{tpu_custom_call.1} parent=5 // pred_check
        %p830 = pneg %p829
      $region62: #{tpu_custom_call.1} parent=5 // pred_check_branch
        %832 = sbr.rel (%p830) target = $region64
      $region63: #{tpu_custom_call.1} parent=5 // pred_region
        %s833 = ssub.s32 %s20, 2
        // Predicated region
        $region65: #{tpu_custom_call.1} parent=63 // pred_check
          %p834 = pneg %p197
        $region66: #{tpu_custom_call.1} parent=63 // pred_check_branch
          %836 = sbr.rel (%p834) target = $region68
        $region67: #{tpu_custom_call.1} parent=63 // pred_region
          %s837 = sand.u32 %s182, 1
          %s838 = scalar_lea.sflag [#allocation4], %s837
          %s839 = sand.u32 %s182, 1
          %s840 = smul.addr %s839, 8
          %s841 = scalar_lea.vmem [#allocation3], %s840
          %843 = dma.done %s838, 128
        $region68: #{tpu_custom_call.1} parent=63 // pred_fallthru
          _
        // Predicated region
        $region69: #{tpu_custom_call.1} parent=63 // pred_check
          %p844 = pneg %p223
        $region70: #{tpu_custom_call.1} parent=63 // pred_check_branch
          %846 = sbr.rel (%p844) target = $region72
        $region71: #{tpu_custom_call.1} parent=63 // pred_region
          %s847 = sand.u32 %s208, 1
          %s848 = scalar_lea.sflag [#allocation6], %s847
          %s849 = sand.u32 %s208, 1
          %s850 = smul.addr %s849, 4
          %s851 = scalar_lea.vmem [#allocation5], %s850
          %853 = dma.done %s848, 64
        $region72: #{tpu_custom_call.1} parent=63 // pred_fallthru
          _
      $region64: #{tpu_custom_call.1} parent=5 // pred_fallthru
        _
    $region6: #{tpu_custom_call.1} parent=1 // loop_footer
      %s24 = sadd.s32 1, %s20
    $region7: #{tpu_custom_call.1} parent=1 // loop_footer_branch
      %19 = sbr.rel target = $region3
    $region8: #{tpu_custom_call.1} parent=1 // loop_exit
      _
    %854 = vsyncpa [#allocation4], 1
    %s855 = scalar_lea.sflag [#allocation4], 1
    %856 = vsyncpa %s855, 1
    %857 = vsyncpa [#allocation6], 1
    %s858 = scalar_lea.sflag [#allocation6], 1
    %859 = vsyncpa %s858, 1

</llo_original>
